<compile_context>
chip_gen: v5e
topology: v5e:2x2
jax: 0.10.0
libtpu: 0.0.40
codegen_flags: <defaults>
</compile_context>

<pallas_src>
import functools

import jax
import jax.numpy as jnp
from jax import lax
from jax.experimental import pallas as pl
from jax.experimental.pallas import tpu as pltpu


def _round_up(x: int, m: int) -> int:
    return (x + m - 1) // m * m


# ---------------------------------------------------------------------------
# Identity path: blocked, lane-dense copy of the whole embedding table.
# ---------------------------------------------------------------------------
_COPY_BLOCK_BYTES = 2 * 1024 * 1024  # per-block tile; x4 buffers -> <= 8 MiB VMEM


def _copy_kernel(x_ref, o_ref):
    o_ref[...] = x_ref[...]


def _blocked_copy(x: jax.Array) -> jax.Array:
    m, l = x.shape
    itemsize = x.dtype.itemsize
    # Rows per block from a byte budget (multiple of 8 sublanes, at least 8).
    rows_budget = max(8, (_COPY_BLOCK_BYTES // max(l * itemsize, 1)) // 8 * 8)
    tile = min(rows_budget, _round_up(m, 8))
    grid = (pl.cdiv(m, tile),)
    nbytes = int(x.size) * itemsize
    return pl.pallas_call(
        _copy_kernel,
        out_shape=jax.ShapeDtypeStruct((m, l), x.dtype),
        grid=grid,
        in_specs=[pl.BlockSpec((tile, l), lambda i: (i, 0))],
        out_specs=pl.BlockSpec((tile, l), lambda i: (i, 0)),
        compiler_params=pltpu.CompilerParams(
            dimension_semantics=("parallel",),  # independent tiles -> megacore
        ),
        cost_estimate=pl.CostEstimate(
            flops=0, transcendentals=0, bytes_accessed=2 * nbytes
        ),
    )(x)


def embed_identity(emb: jax.Array) -> jax.Array:
    """Return a copy of the full table through the lane-dense copy kernel."""
    n, d = emb.shape
    total = n * d
    if total % 128 == 0:
        # Present a lane-dense [total//128, 128] view: every output store is an
        # unmasked full-width vst (the biggest single perf lever here).
        flat = emb.reshape(total // 128, 128)
        return _blocked_copy(flat).reshape(n, d)
    # Fallback: last block dim equals the full row width (always legal).
    return _blocked_copy(emb)


# ---------------------------------------------------------------------------
# Gather path: K rows per grid step, double-buffered manual row DMAs from an
# HBM-resident table (P4 pattern).
# ---------------------------------------------------------------------------
_GATHER_MAX_ROWS = 128  # rows per grid step (multiple of 8)


def _gather_kernel(ids_ref, emb_hbm, out_ref, buf, sems, *, rows):
    step = pl.program_id(0)
    nsteps = pl.num_programs(0)
    slot = step & 1

    def _fetch(block_idx, which_slot):
        base = block_idx * rows

        def _start(r, carry):
            idx = ids_ref[base + r]
            pltpu.make_async_copy(
                emb_hbm.at[idx], buf.at[which_slot, r], sems.at[which_slot]
            ).start()
            return carry

        lax.fori_loop(0, rows, _start, 0)

    # Prime the pipeline: first block into slot 0 (grid axis is "arbitrary",
    # so step 0 always runs first on the core executing this grid).
    @pl.when(step == 0)
    def _():
        _fetch(0, 0)

    # Prefetch the NEXT block into the other slot before waiting on this one,
    # so its HBM latency overlaps this block's wait + output writeback.
    @pl.when(step + 1 < nsteps)
    def _():
        _fetch(step + 1, 1 - slot)

    # Wait for all `rows` row-copies of the current slot (all copies are the
    # same size, so one DMA semaphore per slot collects their completions).
    def _wait(r, carry):
        pltpu.make_async_copy(
            emb_hbm.at[0], buf.at[slot, r], sems.at[slot]
        ).wait()
        return carry

    lax.fori_loop(0, rows, _wait, 0)

    # One (rows, D) output block per grid step (auto-pipelined writeback).
    out_ref[...] = buf[slot]


def embed_lookup(emb: jax.Array, ids: jax.Array) -> jax.Array:
    """Gather rows `ids` from embedding table `emb` ([N, D]) via Pallas."""
    n, d = emb.shape
    n_out = int(ids.shape[0])
    if n_out == 0:
        return jnp.zeros((0, d), emb.dtype)
    rows = min(_GATHER_MAX_ROWS, _round_up(n_out, 8))
    n_pad = _round_up(n_out, rows)
    ids_pad = jnp.pad(ids.astype(jnp.int32), (0, n_pad - n_out))  # pad with row 0
    itemsize = emb.dtype.itemsize

    # TODO(synk): for very large id lists (>> 1e5) stream the ids in per-step
    # SMEM tiles instead of scalar-prefetching the whole array into SMEM.
    kernel = functools.partial(_gather_kernel, rows=rows)
    out = pl.pallas_call(
        kernel,
        out_shape=jax.ShapeDtypeStruct((n_pad, d), emb.dtype),
        grid_spec=pltpu.PrefetchScalarGridSpec(
            num_scalar_prefetch=1,  # ids -> SMEM
            grid=(n_pad // rows,),
            in_specs=[pl.BlockSpec(memory_space=pl.ANY)],  # table stays in HBM
            out_specs=pl.BlockSpec((rows, d), lambda i, ids_ref: (i, 0)),
            scratch_shapes=[
                pltpu.VMEM((2, rows, d), emb.dtype),   # double buffer
                pltpu.SemaphoreType.DMA((2,)),          # one DMA sem per slot
            ],
        ),
        compiler_params=pltpu.CompilerParams(
            # Cross-step scratch state (double buffer) -> must run sequentially.
            dimension_semantics=("arbitrary",),
        ),
        cost_estimate=pl.CostEstimate(
            flops=0,
            transcendentals=0,
            bytes_accessed=2 * n_pad * d * itemsize + n_pad * 4,
        ),
    )(ids_pad, emb)
    return out[:n_out]


# ---------------------------------------------------------------------------
# Module port
# ---------------------------------------------------------------------------
def xavier_uniform_relu(key, num_nodes, embed_size, dtype=jnp.float32):
    """Matches nn.init.xavier_uniform_(tensor, gain=calculate_gain('relu')).

    For a 2-D tensor [N, D]: fan_in = D, fan_out = N,
    bound = gain * sqrt(6 / (fan_in + fan_out)), gain = sqrt(2).
    """
    gain = jnp.sqrt(2.0)
    bound = gain * jnp.sqrt(6.0 / (num_nodes + embed_size))
    return jax.random.uniform(
        key, (num_nodes, embed_size), dtype=dtype, minval=-bound, maxval=bound
    )


class RelGraphEmbed:
    """JAX/Pallas port of the RGCN RelGraphEmbed module.

    `ntype_num_nodes` stands in for the DGL heterograph's
    {ntype: g.number_of_nodes(ntype)} mapping.
    """

    def __init__(self, ntype_num_nodes, embed_size, key):
        self.embed_size = embed_size
        self.embeds = {}
        keys = jax.random.split(key, len(ntype_num_nodes))
        for k, (ntype, n) in zip(keys, sorted(ntype_num_nodes.items())):
            self.embeds[ntype] = xavier_uniform_relu(k, n, embed_size)
        # Note: activation / dropout are unused in the original forward(), so
        # they are intentionally not applied here.

    def forward(self, block=None):
        """Returns {ntype: embedding matrix}.

        If `block` (a dict {ntype: node-id array}) is given, the listed node
        types are gathered through the double-buffered DMA gather kernel; all
        other node types (and the block=None case, which matches the PyTorch
        forward exactly) go through the lane-dense blocked copy kernel."""
        out = {}
        for ntype, emb in self.embeds.items():
            if block is not None and ntype in block:
                out[ntype] = embed_lookup(emb, block[ntype].astype(jnp.int32))
            else:
                out[ntype] = embed_identity(emb)
        return out


if __name__ == "__main__":
    key = jax.random.PRNGKey(0)

    # Small synthetic heterograph: two node types, featureless.
    ntype_num_nodes = {"author": 12, "paper": 20}
    embed_size = 32

    model = RelGraphEmbed(ntype_num_nodes, embed_size, key)

    # forward() with no block -> full embedding tables per ntype.
    result = model.forward()
    result = jax.tree_util.tree_map(jax.block_until_ready, result)

    ok = True
    for ntype, emb in model.embeds.items():
        out = result[ntype]
        ok &= out.shape == emb.shape
        ok &= out.dtype == emb.dtype
        ok &= bool(jnp.allclose(out, emb))

    # Also exercise the batched gather path with a sub-block of node ids
    # (more than one grid step to exercise the double buffer: 20 ids, rows=8).
    paper_ids = jnp.array(
        [3, 0, 19, 7, 11, 2, 5, 18, 9, 1, 14, 6, 13, 4, 17, 8, 10, 12, 15, 16],
        dtype=jnp.int32,
    )
    sub_ids = {"paper": paper_ids}
    sub = model.forward(block=sub_ids)
    sub = jax.tree_util.tree_map(jax.block_until_ready, sub)
    ok &= bool(jnp.allclose(sub["paper"], model.embeds["paper"][paper_ids]))
    ok &= bool(jnp.allclose(sub["author"], model.embeds["author"]))

    if ok:
        print("KERNEL_OK")
    else:
        print("KERNEL_MISMATCH")
</pallas_src>

<mosaic_0001>
module attributes {stable_mosaic.version = 11 : i64} {
  func.func @_copy_kernel(%arg0: i32, %arg1: memref<8x128xf32, #tpu.memory_space<vmem>>, %arg2: memref<8x128xf32, #tpu.memory_space<vmem>>) attributes {dimension_semantics = [#tpu.dimension_semantics<parallel>], iteration_bounds = array<i64: 1>, scalar_prefetch = 0 : i64, scratch_operands = 0 : i64, tpu.core_type = #tpu.core_type<tc>, window_params = [{transform_indices = @transform_0, window_bounds = array<i64: 8, 128>}, {transform_indices = @transform_1, window_bounds = array<i64: 8, 128>}]} {
    %c0 = arith.constant 0 : index
    %c0_0 = arith.constant 0 : index
    %0 = vector.load %arg1[%c0, %c0_0] : memref<8x128xf32, #tpu.memory_space<vmem>>, vector<8x128xf32>
    %c0_1 = arith.constant 0 : index
    %c0_2 = arith.constant 0 : index
    %1 = vector.load %arg2[%c0_1, %c0_2] : memref<8x128xf32, #tpu.memory_space<vmem>>, vector<8x128xf32>
    tpu.vector_store %arg2[%c0_1, %c0_2], %0 {strides = array<i32>} : memref<8x128xf32, #tpu.memory_space<vmem>>, vector<8x128xf32>,
    return
  }
  func.func @transform_0(%arg0: i32) -> (i32, i32) {
    %c0_i32 = arith.constant 0 : i32
    %c0_i32_0 = arith.constant 0 : i32
    return %arg0, %c0_i32 : i32, i32
  }
  func.func @transform_1(%arg0: i32) -> (i32, i32) {
    %c0_i32 = arith.constant 0 : i32
    %c0_i32_0 = arith.constant 0 : i32
    return %arg0, %c0_i32 : i32, i32
  }
}

</mosaic_0001>

<llo_original>
// kernel: tpu_custom_call.1
$region0: #{tpu_custom_call.1}
  #allocation0 [shape = 'u32[]', space=smem, size = 0x4, offset = 0x4, fixed_abs, tag = 'smem constant byte address 0x4 - core index']
  #allocation1 [shape = 'u32[72,128]{1,0:T(1,128)}', space=vmem, size = 0x9000, scoped, tag = 'internal scratch']
  %s0 = inlined_call_operand.hbm [shape: f32[3,128], index: 0, kind: input, shape index: {}]
  %s1 = inlined_call_operand.hbm [shape: f32[3,128], index: 1, kind: output, shape index: {}]
  %s2 = sld [smem:[#allocation0]]
  $region18: #{tpu_custom_call.1} parent=0
    _
  %s4 = ssub.s32 1, %s2
  %s5 = scalar_select 0, %s4, %s2
  $region1: #{tpu_custom_call.1} parent=0
    #allocation2 [shape = 'u8[4096]{0}', space=vmem, size = 0x1000, scoped, tag = 'input window, operand 0, single buffered']
    #allocation3 [shape = 's32[1]{0}', space=sflag, size = 0x4, scoped, tag = 'scoped memory for tpu_custom_call.1']
    #allocation4 [shape = 's32[1]{0}', space=sflag, size = 0x4, scoped, tag = 'scoped memory for tpu_custom_call.1']
    #allocation5 [shape = 'u8[4096]{0}', space=vmem, size = 0x1000, scoped, tag = 'output window, operand 0, single buffered']
    %6 = vsyncpa [#allocation3], 0
    %7 = vsyncpa [#allocation4], 0
    // Predicated region
    $region2: #{tpu_custom_call.1} parent=1 // pred_check
      _
    $region3: #{tpu_custom_call.1} parent=1 // pred_check_branch
      %9 = sbr.rel (0) target = $region5
    $region4: #{tpu_custom_call.1} parent=1 // pred_region
      %11 = vsyncadd [#allocation3], 64
      %s12 = sshll.u32 %s0, 4
      %s13 = int_to_ptr.hbm [resolvable:$true] %s12
      %s14 = sshll.u32 [#allocation2], 4
      %s15 = int_to_ptr.vmem [resolvable:$true] %s14
      %20 = dma.hbm_to_vmem [thread:$0]  %s13, 64, %s15, [#allocation3], 64, 64, 4
    $region5: #{tpu_custom_call.1} parent=1 // pred_fallthru
      _
    // Predicated region
    $region6: #{tpu_custom_call.1} parent=1 // pred_check
      _
    $region7: #{tpu_custom_call.1} parent=1 // pred_check_branch
      %22 = sbr.rel (0) target = $region9
    $region8: #{tpu_custom_call.1} parent=1 // pred_region
      %24 = dma.done [#allocation3], 128
    $region9: #{tpu_custom_call.1} parent=1 // pred_fallthru
      _
    %v25 = vld [vmem:[#allocation2] sm:$0xff]
    %26 = vst [vmem:[#allocation5] sm:$0xff] %v25
    // Predicated region
    $region10: #{tpu_custom_call.1} parent=1 // pred_check
      _
    $region11: #{tpu_custom_call.1} parent=1 // pred_check_branch
      %28 = sbr.rel (0) target = $region13
    $region12: #{tpu_custom_call.1} parent=1 // pred_region
      %30 = vsyncadd [#allocation4], 64
      %s31 = sshll.u32 [#allocation5], 4
      %s32 = int_to_ptr.vmem [resolvable:$true] %s31
      %s33 = sshll.u32 %s1, 4
      %s34 = int_to_ptr.hbm [resolvable:$true] %s33
      %39 = dma.vmem_to_hbm [thread:$0]  %s32, 64, %s34, [#allocation4], 64, 64, 4
    $region13: #{tpu_custom_call.1} parent=1 // pred_fallthru
      _
    // Predicated region
    $region14: #{tpu_custom_call.1} parent=1 // pred_check
      _
    $region15: #{tpu_custom_call.1} parent=1 // pred_check_branch
      %41 = sbr.rel (0) target = $region17
    $region16: #{tpu_custom_call.1} parent=1 // pred_region
      %43 = dma.done [#allocation4], 128
    $region17: #{tpu_custom_call.1} parent=1 // pred_fallthru
      _
    %44 = vsyncpa [#allocation3], 1
    %45 = vsyncpa [#allocation4], 1

</llo_original>
